<compile_context>
chip_gen: v7x
topology: tpu7x:2x2x1
jax: 0.10.0
libtpu: 0.0.40
codegen_flags: <defaults>
</compile_context>

<pallas_src>
import functools

import jax
import jax.numpy as jnp
from jax import lax
from jax.experimental import pallas as pl
from jax.experimental.pallas import tpu as pltpu

KD = KH = KW = 3          # 3x3x3 conv
PAD = 1                   # "same" padding
EPS = 1e-5                # torch.nn.InstanceNorm3d default eps
LANE = 128
SUBLANE = 8


def _round_up(x, m):
    return (x + m - 1) // m * m


def _fused_kernel(p_ref, w_ref, g_ref, b_ref, o_ref, sum_sc, ssq_sc,
                  *, num_m_tiles, m_valid):
    """One grid step = (batch sample n, spatial tile mt).

    p_ref : (1, Kp, TM)   bf16  im2col patches (K = 27*C_in, zero padded)
    w_ref : (Cp, Kp)      bf16  conv weights, one out-channel per row
    g_ref : (Cp, 1)       f32   InstanceNorm gamma
    b_ref : (Cp, 1)       f32   InstanceNorm beta
    o_ref : (1, Cp, Mp)   f32   per-sample output block (resident across mt)
    sum_sc, ssq_sc : (Cp, 1) f32  running per-channel sum / sum-of-squares
    """
    mt = pl.program_id(1)
    tm = p_ref.shape[-1]

    @pl.when(mt == 0)
    def _():
        sum_sc[...] = jnp.zeros_like(sum_sc)
        ssq_sc[...] = jnp.zeros_like(ssq_sc)

    # ---- Conv3d for this spatial tile: a single lane-dense MXU matmul -------
    acc = jnp.dot(w_ref[...], p_ref[0],
                  preferred_element_type=jnp.float32)          # (Cp, TM) f32

    # ---- one-pass InstanceNorm statistics (zero-padded columns add 0) -------
    sum_sc[...] += jnp.sum(acc, axis=1, keepdims=True)
    ssq_sc[...] += jnp.sum(acc * acc, axis=1, keepdims=True)

    # stash the un-normalized conv output in the resident output block
    start = pl.multiple_of(mt * tm, LANE)
    o_ref[0, :, pl.ds(start, tm)] = acc

    # ---- last spatial tile: normalize + affine + ReLU over the whole sample -
    @pl.when(mt == num_m_tiles - 1)
    def _():
        inv_m = jnp.float32(1.0 / m_valid)
        mean = sum_sc[...] * inv_m                       # (Cp, 1)
        var = ssq_sc[...] * inv_m - mean * mean          # biased, like torch
        scale = lax.rsqrt(var + EPS) * g_ref[...]        # (Cp, 1)
        shift = b_ref[...] - mean * scale                # (Cp, 1)

        @pl.loop(0, num_m_tiles)
        def _(t):
            s = pl.multiple_of(t * tm, LANE)
            blk = o_ref[0, :, pl.ds(s, tm)]
            o_ref[0, :, pl.ds(s, tm)] = jnp.maximum(blk * scale + shift, 0.0)


def basic_conv3d(x_ncdhw, w_oidhw, gamma, beta, *, m_tile=256):
    """Fused Conv3d(3,1,1,bias=False) + InstanceNorm3d(affine) + ReLU.

    x_ncdhw : (N, C_in, D, H, W) f32      (PyTorch layout)
    w_oidhw : (C_out, C_in, 3, 3, 3) f32  (PyTorch layout)
    gamma, beta : (C_out,) f32
    returns : (N, C_out, D, H, W) f32
    """
    N, C_in, D, H, W = x_ncdhw.shape
    C_out = w_oidhw.shape[0]
    M = D * H * W
    K = C_in * KD * KH * KW

    TM = min(m_tile, _round_up(M, LANE))   # lane-dense spatial tile
    Mp = _round_up(M, TM)
    Kp = _round_up(K, 16)                  # bf16 sublane packing
    Cp = _round_up(C_out, SUBLANE)
    num_m_tiles = Mp // TM

    # ---- im2col (transposed): patches[n, (ci,kd,kh,kw), d*H*W + h*W + w] ----
    xp = jnp.pad(x_ncdhw, ((0, 0), (0, 0), (PAD, PAD), (PAD, PAD), (PAD, PAD)))
    taps = []
    for kd in range(KD):
        for kh in range(KH):
            for kw in range(KW):
                taps.append(lax.slice(
                    xp, (0, 0, kd, kh, kw), (N, C_in, kd + D, kh + H, kw + W)))
    patches = jnp.stack(taps, axis=2)                  # (N, C_in, 27, D, H, W)
    patches = patches.reshape(N, K, M)
    patches = jnp.pad(patches, ((0, 0), (0, Kp - K), (0, Mp - M)))
    patches = patches.astype(jnp.bfloat16)

    wt = w_oidhw.reshape(C_out, K)                     # K ordered (ci,kd,kh,kw)
    wt = jnp.pad(wt, ((0, Cp - C_out), (0, Kp - K))).astype(jnp.bfloat16)
    g = jnp.pad(gamma.reshape(C_out, 1).astype(jnp.float32),
                ((0, Cp - C_out), (0, 0)))
    b = jnp.pad(beta.reshape(C_out, 1).astype(jnp.float32),
                ((0, Cp - C_out), (0, 0)))

    kernel = functools.partial(
        _fused_kernel, num_m_tiles=num_m_tiles, m_valid=M)

    out = pl.pallas_call(
        kernel,
        out_shape=jax.ShapeDtypeStruct((N, Cp, Mp), jnp.float32),
        grid=(N, num_m_tiles),
        in_specs=[
            pl.BlockSpec((1, Kp, TM), lambda n, mt: (n, 0, mt)),
            pl.BlockSpec((Cp, Kp), lambda n, mt: (0, 0)),
            pl.BlockSpec((Cp, 1), lambda n, mt: (0, 0)),
            pl.BlockSpec((Cp, 1), lambda n, mt: (0, 0)),
        ],
        out_specs=pl.BlockSpec((1, Cp, Mp), lambda n, mt: (n, 0, 0)),
        scratch_shapes=[
            pltpu.VMEM((Cp, 1), jnp.float32),     # per-channel sum
            pltpu.VMEM((Cp, 1), jnp.float32),     # per-channel sum of squares
        ],
        compiler_params=pltpu.CompilerParams(
            dimension_semantics=("parallel", "arbitrary"),
            vmem_limit_bytes=64 * 1024 * 1024),
    )(patches, wt, g, b)

    # strip channel / spatial padding, back to PyTorch NCDHW layout
    return out[:, :C_out, :M].reshape(N, C_out, D, H, W)


# ----------------------------- references ----------------------------------


def _instance_norm_relu(y, gamma, beta):
    mean = jnp.mean(y, axis=(2, 3, 4), keepdims=True)
    var = jnp.mean((y - mean) ** 2, axis=(2, 3, 4), keepdims=True)
    y = (y - mean) * lax.rsqrt(var + EPS)
    y = y * gamma.reshape(1, -1, 1, 1, 1) + beta.reshape(1, -1, 1, 1, 1)
    return jnp.maximum(y, 0.0)


def reference_forward(x_ncdhw, w_oidhw, gamma, beta, *,
                      matmul_dtype=jnp.float32):
    """Pure-JAX reference. matmul_dtype=bfloat16 mirrors the kernel's bf16
    conv operands (f32 accumulation); float32 is full PyTorch semantics."""
    y = lax.conv_general_dilated(
        x_ncdhw.astype(matmul_dtype), w_oidhw.astype(matmul_dtype),
        window_strides=(1, 1, 1),
        padding=((PAD, PAD), (PAD, PAD), (PAD, PAD)),
        dimension_numbers=("NCDHW", "OIDHW", "NCDHW"),
        preferred_element_type=jnp.float32)
    return _instance_norm_relu(y, gamma, beta)


if __name__ == "__main__":
    # Small synthetic problem: batch=2, in_channels=4, out_channels=8, D=H=W=8.
    N, C_in, C_out = 2, 4, 8
    D = H = W = 8

    key = jax.random.PRNGKey(0)
    kx, kw, kg, kb = jax.random.split(key, 4)

    x = jax.random.normal(kx, (N, C_in, D, H, W), jnp.float32)
    w = 0.1 * jax.random.normal(kw, (C_out, C_in, KD, KH, KW), jnp.float32)
    gamma = 1.0 + 0.1 * jax.random.normal(kg, (C_out,), jnp.float32)
    beta = 0.1 * jax.random.normal(kb, (C_out,), jnp.float32)

    out = jax.block_until_ready(basic_conv3d(x, w, gamma, beta))
    assert out.shape == (N, C_out, D, H, W)

    # Strict check against a reference using the same bf16 matmul operands.
    ref_bf16 = jax.block_until_ready(
        reference_forward(x, w, gamma, beta, matmul_dtype=jnp.bfloat16))
    assert jnp.allclose(out, ref_bf16, atol=1e-3, rtol=1e-3), (
        float(jnp.max(jnp.abs(out - ref_bf16))))

    # Sanity check against the full-f32 PyTorch-semantics reference
    # (tolerance accounts for the bf16 conv operands).
    ref_f32 = jax.block_until_ready(reference_forward(x, w, gamma, beta))
    assert jnp.allclose(out, ref_f32, atol=5e-2, rtol=5e-2), (
        float(jnp.max(jnp.abs(out - ref_f32))))

    print("KERNEL_OK")
</pallas_src>

<mosaic_0001>
module attributes {stable_mosaic.version = 11 : i64} {
  func.func @_fused_kernel(%arg0: i32, %arg1: i32, %arg2: memref<1x112x256xbf16, #tpu.memory_space<vmem>>, %arg3: memref<8x112xbf16, #tpu.memory_space<vmem>>, %arg4: memref<8x1xf32, #tpu.memory_space<vmem>>, %arg5: memref<8x1xf32, #tpu.memory_space<vmem>>, %arg6: memref<1x8x512xf32, #tpu.memory_space<vmem>>, %arg7: memref<8x1xf32, #tpu.memory_space<vmem>>, %arg8: memref<8x1xf32, #tpu.memory_space<vmem>>) attributes {dimension_semantics = [#tpu.dimension_semantics<parallel>, #tpu.dimension_semantics<arbitrary>], iteration_bounds = array<i64: 2, 2>, scalar_prefetch = 0 : i64, scratch_operands = 2 : i64, tpu.core_type = #tpu.core_type<tc>, window_params = [{transform_indices = @transform_0, window_bounds = array<i64: 1, 112, 256>}, {pipeline_mode = #tpu.pipeline_mode<synchronous>, transform_indices = @transform_1, window_bounds = array<i64: 8, 112>}, {pipeline_mode = #tpu.pipeline_mode<synchronous>, transform_indices = @transform_2, window_bounds = array<i64: 8, 1>}, {pipeline_mode = #tpu.pipeline_mode<synchronous>, transform_indices = @transform_3, window_bounds = array<i64: 8, 1>}, {transform_indices = @transform_4, window_bounds = array<i64: 1, 8, 512>}]} {
    %c0_i32 = arith.constant 0 : i32
    %0 = arith.cmpi eq, %arg1, %c0_i32 : i32
    %1 = arith.extui %0 : i1 to i32
    %c0_i32_0 = arith.constant 0 : i32
    %2 = arith.cmpi ne, %1, %c0_i32_0 : i32
    scf.if %2 {
      %cst_18 = arith.constant 0.000000e+00 : f32
      %27 = vector.broadcast %cst_18 : f32 to vector<8x1xf32>
      %c0_19 = arith.constant 0 : index
      %c0_20 = arith.constant 0 : index
      %28 = vector.load %arg7[%c0_19, %c0_20] : memref<8x1xf32, #tpu.memory_space<vmem>>, vector<8x1xf32>
      tpu.vector_store %arg7[%c0_19, %c0_20], %27 {strides = array<i32>} : memref<8x1xf32, #tpu.memory_space<vmem>>, vector<8x1xf32>,
      %cst_21 = arith.constant 0.000000e+00 : f32
      %29 = vector.broadcast %cst_21 : f32 to vector<8x1xf32>
      %c0_22 = arith.constant 0 : index
      %c0_23 = arith.constant 0 : index
      %30 = vector.load %arg8[%c0_22, %c0_23] : memref<8x1xf32, #tpu.memory_space<vmem>>, vector<8x1xf32>
      tpu.vector_store %arg8[%c0_22, %c0_23], %29 {strides = array<i32>} : memref<8x1xf32, #tpu.memory_space<vmem>>, vector<8x1xf32>,
    } else {
    }
    %c0 = arith.constant 0 : index
    %c0_1 = arith.constant 0 : index
    %3 = vector.load %arg3[%c0, %c0_1] : memref<8x112xbf16, #tpu.memory_space<vmem>>, vector<8x112xbf16>
    %c0_2 = arith.constant 0 : index
    %c0_3 = arith.constant 0 : index
    %c0_4 = arith.constant 0 : index
    %4 = vector.load %arg2[%c0_2, %c0_3, %c0_4] : memref<1x112x256xbf16, #tpu.memory_space<vmem>>, vector<1x112x256xbf16>
    %5 = vector.shape_cast %4 : vector<1x112x256xbf16> to vector<112x256xbf16>
    %cst = arith.constant dense<0.000000e+00> : vector<8x256xf32>
    %6 = tpu.matmul %3, %5, %cst {dimension_numbers = #tpu.dot_dimension_numbers<[1], [0], [0], [1], [0, 0, 1, 1], [], []>} : vector<8x112xbf16>, vector<112x256xbf16>, vector<8x256xf32> -> vector<8x256xf32>
    %c0_5 = arith.constant 0 : index
    %c0_6 = arith.constant 0 : index
    %7 = vector.load %arg7[%c0_5, %c0_6] : memref<8x1xf32, #tpu.memory_space<vmem>>, vector<8x1xf32>
    %cst_7 = arith.constant dense<0.000000e+00> : vector<8xf32>
    %8 = vector.multi_reduction <add>, %6, %cst_7 [1] : vector<8x256xf32> to vector<8xf32>
    %9 = vector.shape_cast %8 : vector<8xf32> to vector<8x1xf32>
    %10 = arith.addf %7, %9 : vector<8x1xf32>
    %c0_8 = arith.constant 0 : index
    %c0_9 = arith.constant 0 : index
    %11 = vector.load %arg7[%c0_8, %c0_9] : memref<8x1xf32, #tpu.memory_space<vmem>>, vector<8x1xf32>
    tpu.vector_store %arg7[%c0_8, %c0_9], %10 {strides = array<i32>} : memref<8x1xf32, #tpu.memory_space<vmem>>, vector<8x1xf32>,
    %c0_10 = arith.constant 0 : index
    %c0_11 = arith.constant 0 : index
    %12 = vector.load %arg8[%c0_10, %c0_11] : memref<8x1xf32, #tpu.memory_space<vmem>>, vector<8x1xf32>
    %13 = arith.mulf %6, %6 : vector<8x256xf32>
    %cst_12 = arith.constant dense<0.000000e+00> : vector<8xf32>
    %14 = vector.multi_reduction <add>, %13, %cst_12 [1] : vector<8x256xf32> to vector<8xf32>
    %15 = vector.shape_cast %14 : vector<8xf32> to vector<8x1xf32>
    %16 = arith.addf %12, %15 : vector<8x1xf32>
    %c0_13 = arith.constant 0 : index
    %c0_14 = arith.constant 0 : index
    %17 = vector.load %arg8[%c0_13, %c0_14] : memref<8x1xf32, #tpu.memory_space<vmem>>, vector<8x1xf32>
    tpu.vector_store %arg8[%c0_13, %c0_14], %16 {strides = array<i32>} : memref<8x1xf32, #tpu.memory_space<vmem>>, vector<8x1xf32>,
    %c256_i32 = arith.constant 256 : i32
    %18 = arith.muli %arg1, %c256_i32 : i32
    %19 = tpu.assume_multiple %18, 128 : i32
    %c0_15 = arith.constant 0 : index
    %c0_16 = arith.constant 0 : index
    %20 = arith.index_cast %19 : i32 to index
    %21 = vector.load %arg6[%c0_15, %c0_16, %20] : memref<1x8x512xf32, #tpu.memory_space<vmem>>, vector<1x8x256xf32>
    %22 = vector.shape_cast %21 : vector<1x8x256xf32> to vector<8x256xf32>
    %23 = vector.shape_cast %6 : vector<8x256xf32> to vector<1x8x256xf32>
    tpu.vector_store %arg6[%c0_15, %c0_16, %20], %23 {strides = array<i32>} : memref<1x8x512xf32, #tpu.memory_space<vmem>>, vector<1x8x256xf32>,
    %c1_i32 = arith.constant 1 : i32
    %24 = arith.cmpi eq, %arg1, %c1_i32 : i32
    %25 = arith.extui %24 : i1 to i32
    %c0_i32_17 = arith.constant 0 : i32
    %26 = arith.cmpi ne, %25, %c0_i32_17 : i32
    scf.if %26 {
      %c0_18 = arith.constant 0 : index
      %c0_19 = arith.constant 0 : index
      %27 = vector.load %arg7[%c0_18, %c0_19] : memref<8x1xf32, #tpu.memory_space<vmem>>, vector<8x1xf32>
      %cst_20 = arith.constant 0.001953125 : f32
      %28 = vector.broadcast %cst_20 : f32 to vector<8x1xf32>
      %29 = arith.mulf %27, %28 : vector<8x1xf32>
      %c0_21 = arith.constant 0 : index
      %c0_22 = arith.constant 0 : index
      %30 = vector.load %arg8[%c0_21, %c0_22] : memref<8x1xf32, #tpu.memory_space<vmem>>, vector<8x1xf32>
      %cst_23 = arith.constant 0.001953125 : f32
      %31 = vector.broadcast %cst_23 : f32 to vector<8x1xf32>
      %32 = arith.mulf %30, %31 : vector<8x1xf32>
      %33 = arith.mulf %29, %29 : vector<8x1xf32>
      %34 = arith.subf %32, %33 : vector<8x1xf32>
      %cst_24 = arith.constant 9.99999974E-6 : f32
      %35 = vector.broadcast %cst_24 : f32 to vector<8x1xf32>
      %36 = arith.addf %34, %35 : vector<8x1xf32>
      %37 = math.rsqrt %36 : vector<8x1xf32>
      %c0_25 = arith.constant 0 : index
      %c0_26 = arith.constant 0 : index
      %38 = vector.load %arg4[%c0_25, %c0_26] : memref<8x1xf32, #tpu.memory_space<vmem>>, vector<8x1xf32>
      %39 = arith.mulf %37, %38 : vector<8x1xf32>
      %c0_27 = arith.constant 0 : index
      %c0_28 = arith.constant 0 : index
      %40 = vector.load %arg5[%c0_27, %c0_28] : memref<8x1xf32, #tpu.memory_space<vmem>>, vector<8x1xf32>
      %41 = arith.mulf %29, %39 : vector<8x1xf32>
      %42 = arith.subf %40, %41 : vector<8x1xf32>
      %c0_i32_29 = arith.constant 0 : i32
      %c2_i32 = arith.constant 2 : i32
      %43 = arith.addi %c0_i32_29, %c2_i32 : i32
      %c1_i32_30 = arith.constant 1 : i32
      scf.for %arg9 = %c0_i32_29 to %43 step %c1_i32_30  : i32 {
        %c1_i32_32 = arith.constant 1 : i32
        %44 = arith.muli %arg9, %c1_i32_32 : i32
        %c0_i32_33 = arith.constant 0 : i32
        %45 = arith.addi %c0_i32_33, %44 : i32
        %c256_i32_34 = arith.constant 256 : i32
        %46 = arith.muli %45, %c256_i32_34 : i32
        %47 = tpu.assume_multiple %46, 128 : i32
        %c0_35 = arith.constant 0 : index
        %c0_36 = arith.constant 0 : index
        %48 = arith.index_cast %47 : i32 to index
        %49 = vector.load %arg6[%c0_35, %c0_36, %48] : memref<1x8x512xf32, #tpu.memory_space<vmem>>, vector<1x8x256xf32>
        %50 = vector.shape_cast %49 : vector<1x8x256xf32> to vector<8x256xf32>
        %51 = vector.broadcast %39 : vector<8x1xf32> to vector<8x256xf32>
        %52 = arith.mulf %50, %51 : vector<8x256xf32>
        %53 = vector.broadcast %42 : vector<8x1xf32> to vector<8x256xf32>
        %54 = arith.addf %52, %53 : vector<8x256xf32>
        %cst_37 = arith.constant 0.000000e+00 : f32
        %55 = vector.broadcast %cst_37 : f32 to vector<8x256xf32>
        %56 = arith.maximumf %54, %55 : vector<8x256xf32>
        %c0_38 = arith.constant 0 : index
        %c0_39 = arith.constant 0 : index
        %57 = arith.index_cast %47 : i32 to index
        %58 = vector.load %arg6[%c0_38, %c0_39, %57] : memref<1x8x512xf32, #tpu.memory_space<vmem>>, vector<1x8x256xf32>
        %59 = vector.shape_cast %58 : vector<1x8x256xf32> to vector<8x256xf32>
        %60 = vector.shape_cast %56 : vector<8x256xf32> to vector<1x8x256xf32>
        tpu.vector_store %arg6[%c0_38, %c0_39, %57], %60 {strides = array<i32>} : memref<1x8x512xf32, #tpu.memory_space<vmem>>, vector<1x8x256xf32>,
      }
      %c2_i32_31 = arith.constant 2 : i32
    } else {
    }
    return
  }
  func.func @transform_0(%arg0: i32, %arg1: i32) -> (i32, i32, i32) {
    %c0_i32 = arith.constant 0 : i32
    %c0_i32_0 = arith.constant 0 : i32
    return %arg0, %c0_i32, %arg1 : i32, i32, i32
  }
  func.func @transform_1(%arg0: i32, %arg1: i32) -> (i32, i32) {
    %c0_i32 = arith.constant 0 : i32
    %c0_i32_0 = arith.constant 0 : i32
    %c0_i32_1 = arith.constant 0 : i32
    return %c0_i32, %c0_i32_0 : i32, i32
  }
  func.func @transform_2(%arg0: i32, %arg1: i32) -> (i32, i32) {
    %c0_i32 = arith.constant 0 : i32
    %c0_i32_0 = arith.constant 0 : i32
    %c0_i32_1 = arith.constant 0 : i32
    return %c0_i32, %c0_i32_0 : i32, i32
  }
  func.func @transform_3(%arg0: i32, %arg1: i32) -> (i32, i32) {
    %c0_i32 = arith.constant 0 : i32
    %c0_i32_0 = arith.constant 0 : i32
    %c0_i32_1 = arith.constant 0 : i32
    return %c0_i32, %c0_i32_0 : i32, i32
  }
  func.func @transform_4(%arg0: i32, %arg1: i32) -> (i32, i32, i32) {
    %c0_i32 = arith.constant 0 : i32
    %c0_i32_0 = arith.constant 0 : i32
    %c0_i32_1 = arith.constant 0 : i32
    return %arg0, %c0_i32, %c0_i32_0 : i32, i32, i32
  }
}

</mosaic_0001>

<llo_original>
// kernel: tpu_custom_call.1
$region0: #{tpu_custom_call.1}
  #allocation0 [shape = 'u32[]', space=smem, size = 0x4, offset = 0x4, fixed_abs, tag = 'smem constant byte address 0x4 - core index']
  #allocation1 [shape = 'u32[144,128]{1,0:T(1,128)}', space=vmem, size = 0x12000, scoped, tag = 'internal scratch']
  #allocation2 [shape = 'f32[8,1]{1,0:T(8,128)}', space=vmem, size = 0x1000, scoped, tag = 'scratch operand']
  #allocation3 [shape = 'f32[8,1]{1,0:T(8,128)}', space=vmem, size = 0x1000, scoped, tag = 'scratch operand']
  %s0 = inlined_call_operand.hbm [shape: bf16[2,112,512], index: 0, kind: input, shape index: {}]
  %s1 = inlined_call_operand.hbm [shape: bf16[8,112], index: 1, kind: input, shape index: {}]
  %s2 = inlined_call_operand.hbm [shape: f32[8,1], index: 2, kind: input, shape index: {}]
  %s3 = inlined_call_operand.hbm [shape: f32[8,1], index: 3, kind: input, shape index: {}]
  %s4 = inlined_call_operand.hbm [shape: f32[2,8,512], index: 4, kind: output, shape index: {}]
  %s5 = sld [smem:[#allocation0]]
  $region80: #{tpu_custom_call.1} parent=0
    _
  %s7 = ssub.s32 1, %s5
  %s8 = scalar_select 0, %s7, %s5
  $region1: #{tpu_custom_call.1} parent=0
    #allocation4 [shape = 'u8[114688]{0}', space=vmem, size = 0x1c000, scoped, tag = 'input window, operand 0']
    #allocation5 [shape = 's32[2]{0}', space=sflag, size = 0x8, scoped, tag = 'scoped memory for tpu_custom_call.1']
    #allocation6 [shape = 's32[2]{0}', space=sflag, size = 0x8, scoped, tag = 'scoped memory for tpu_custom_call.1']
    #allocation7 [shape = 'u8[2048]{0}', space=vmem, size = 0x800, scoped, tag = 'input window, operand 1, single buffered']
    #allocation8 [shape = 's32[1]{0}', space=sflag, size = 0x4, scoped, tag = 'scoped memory for tpu_custom_call.1']
    #allocation9 [shape = 'u8[4096]{0}', space=vmem, size = 0x1000, scoped, tag = 'input window, operand 2, single buffered']
    #allocation10 [shape = 'u8[4096]{0}', space=vmem, size = 0x1000, scoped, tag = 'input window, operand 3, single buffered']
    #allocation11 [shape = 's32[1]{0}', space=sflag, size = 0x4, scoped, tag = 'scoped memory for tpu_custom_call.1']
    #allocation12 [shape = 'u8[32768]{0}', space=vmem, size = 0x8000, scoped, tag = 'output window, operand 0']
    %9 = vsyncpa [#allocation5], 0
    %s10 = scalar_lea.sflag [#allocation5], 1
    %11 = vsyncpa %s10, 0
    %12 = vsyncpa [#allocation8], 0
    %13 = vsyncpa [#allocation11], 0
    %14 = vsyncpa [#allocation6], 0
    %s15 = scalar_lea.sflag [#allocation6], 1
    %16 = vsyncpa %s15, 0
    loop: start=0, step=1, limit=6
    $region2: #{tpu_custom_call.1} parent=1 // loop_pre_header
      _
    $region3: #{tpu_custom_call.1} parent=1 // loop_header
      %s18 = sphi 0, %s22
      %p19 = scmp.ge.s32.totalorder %s18, 6
      %s25 = sphi 0, %s37
      %s26 = sphi 0, %s33
      %s27 = sphi 0, %s25
      %s28 = sphi 0, %s26
      %s29 = sphi 0, %s27
      %s30 = sphi 0, %s28
      %s42 = sphi 0, %s44
      %s45 = sphi 0, %s42
      %s46 = sphi 0, %s45
      %s62 = sphi 0, %s46
      %s66 = sphi 0, %s66
      %s68 = sphi 0, %s66
      %s69 = sphi 0, %s68
      %s83 = sphi 0, %s69
      %s87 = sphi 0, %s87
      %s89 = sphi 0, %s87
      %s90 = sphi 0, %s89
      %s104 = sphi 0, %s90
      %s108 = sphi 0, %s108
      %s110 = sphi 0, %s108
      %s111 = sphi 0, %s110
      %s125 = sphi 0, %s111
      %s131 = sphi 0, %s133
      %s134 = sphi 0, %s131
      %s135 = sphi 0, %s134
      %s151 = sphi 0, %s135
    $region4: #{tpu_custom_call.1} parent=1 // loop_header_branch
      %21 = sbr.rel (%p19) target = $region8
    $region5: #{tpu_custom_call.1} parent=1 // loop_body
      %s23 = ssub.s32 %s18, 1
      %s24 = ssub.s32 %s18, 2
      %s31 = sadd.s32 1, %s26
      %p32 = scmp.ge.s32.totalorder %s31, 2
      %s33 = scalar_select %p32, 0, %s31
      %s34 = sadd.s32 1, %s25
      %s35 = scalar_select %p32, %s34, %s25
      %p36 = scmp.ge.s32.totalorder %s35, 2
      %s37 = scalar_select %p36, 0, %s35
      %s38 = ssub.s32 %s25, %s37
      %s39 = ssub.s32 %s26, %s33
      %s40 = sor.u32 %s38, %s39
      %p41 = scmp.eq.s32.totalorder %s40, 0
      %s43 = sadd.s32 %s42, 1
      %s44 = scalar_select %p41, %s42, %s43
      %p47 = pneg %p41
      %p48 = scmp.eq.s32.totalorder %s18, 3
      %p49 = por %p47, %p48
      %p50 = scmp.ne.s32.totalorder %s42, %s45
      %p51 = scmp.eq.s32.totalorder %s18, 0
      %p52 = por %p50, %p51
      %p53 = scmp.ne.s32.totalorder %s42, %s45
      %p54 = scmp.eq.s32.totalorder %s23, 3
      %p55 = por %p53, %p54
      %p56 = scmp.ne.s32.totalorder %s45, %s46
      %p57 = scmp.eq.s32.totalorder %s23, 0
      %p58 = por %p56, %p57
      %p59 = scmp.ne.s32.totalorder %s45, %s46
      %p60 = scmp.eq.s32.totalorder %s24, 3
      %p61 = por %p59, %p60
      %p63 = scmp.ne.s32.totalorder %s46, %s62
      %p64 = scmp.eq.s32.totalorder %s24, 0
      %p65 = por %p63, %p64
      %s67 = sadd.s32 %s66, 1
      %p70 = scmp.eq.s32.totalorder %s18, 3
      %p71 = scmp.ne.s32.totalorder %s66, %s68
      %p72 = scmp.eq.s32.totalorder %s18, 0
      %p73 = por %p71, %p72
      %p74 = scmp.ne.s32.totalorder %s66, %s68
      %p75 = scmp.eq.s32.totalorder %s23, 3
      %p76 = por %p74, %p75
      %p77 = scmp.ne.s32.totalorder %s68, %s69
      %p78 = scmp.eq.s32.totalorder %s23, 0
      %p79 = por %p77, %p78
      %p80 = scmp.ne.s32.totalorder %s68, %s69
      %p81 = scmp.eq.s32.totalorder %s24, 3
      %p82 = por %p80, %p81
      %p84 = scmp.ne.s32.totalorder %s69, %s83
      %p85 = scmp.eq.s32.totalorder %s24, 0
      %p86 = por %p84, %p85
      %s88 = sadd.s32 %s87, 1
      %p91 = scmp.eq.s32.totalorder %s18, 3
      %p92 = scmp.ne.s32.totalorder %s87, %s89
      %p93 = scmp.eq.s32.totalorder %s18, 0
      %p94 = por %p92, %p93
      %p95 = scmp.ne.s32.totalorder %s87, %s89
      %p96 = scmp.eq.s32.totalorder %s23, 3
      %p97 = por %p95, %p96
      %p98 = scmp.ne.s32.totalorder %s89, %s90
      %p99 = scmp.eq.s32.totalorder %s23, 0
      %p100 = por %p98, %p99
      %p101 = scmp.ne.s32.totalorder %s89, %s90
      %p102 = scmp.eq.s32.totalorder %s24, 3
      %p103 = por %p101, %p102
      %p105 = scmp.ne.s32.totalorder %s90, %s104
      %p106 = scmp.eq.s32.totalorder %s24, 0
      %p107 = por %p105, %p106
      %s109 = sadd.s32 %s108, 1
      %p112 = scmp.eq.s32.totalorder %s18, 3
      %p113 = scmp.ne.s32.totalorder %s108, %s110
      %p114 = scmp.eq.s32.totalorder %s18, 0
      %p115 = por %p113, %p114
      %p116 = scmp.ne.s32.totalorder %s108, %s110
      %p117 = scmp.eq.s32.totalorder %s23, 3
      %p118 = por %p116, %p117
      %p119 = scmp.ne.s32.totalorder %s110, %s111
      %p120 = scmp.eq.s32.totalorder %s23, 0
      %p121 = por %p119, %p120
      %p122 = scmp.ne.s32.totalorder %s110, %s111
      %p123 = scmp.eq.s32.totalorder %s24, 3
      %p124 = por %p122, %p123
      %p126 = scmp.ne.s32.totalorder %s111, %s125
      %p127 = scmp.eq.s32.totalorder %s24, 0
      %p128 = por %p126, %p127
      %s129 = ssub.s32 %s25, %s37
      %p130 = scmp.eq.s32.totalorder %s129, 0
      %s132 = sadd.s32 %s131, 1
      %s133 = scalar_select %p130, %s131, %s132
      %p136 = pneg %p130
      %p137 = scmp.eq.s32.totalorder %s18, 3
      %p138 = por %p136, %p137
      %p139 = scmp.ne.s32.totalorder %s131, %s134
      %p140 = scmp.eq.s32.totalorder %s18, 0
      %p141 = por %p139, %p140
      %p142 = scmp.ne.s32.totalorder %s131, %s134
      %p143 = scmp.eq.s32.totalorder %s23, 3
      %p144 = por %p142, %p143
      %p145 = scmp.ne.s32.totalorder %s134, %s135
      %p146 = scmp.eq.s32.totalorder %s23, 0
      %p147 = por %p145, %p146
      %p148 = scmp.ne.s32.totalorder %s134, %s135
      %p149 = scmp.eq.s32.totalorder %s24, 3
      %p150 = por %p148, %p149
      %p152 = scmp.ne.s32.totalorder %s135, %s151
      %p153 = scmp.eq.s32.totalorder %s24, 0
      %p154 = por %p152, %p153
      %p155 = scmp.le.s32.totalorder 1, %s18
      %p156 = scmp.lt.s32.totalorder %s18, 5
      %p157 = pnand %p155, %p156
      %p158 = pneg %p157
      // Predicated region
      $region9: #{tpu_custom_call.1} parent=5 // pred_check
        _
      $region10: #{tpu_custom_call.1} parent=5 // pred_check_branch
        %160 = sbr.rel (%p157) target = $region12
      $region11: #{tpu_custom_call.1} parent=5 // pred_region
        %s161 = ssub.s32 %s18, 1
        // Predicated region
        $region13: #{tpu_custom_call.1} parent=11 // pred_check
          %p162 = pneg %p79
        $region14: #{tpu_custom_call.1} parent=11 // pred_check_branch
          %164 = sbr.rel (%p162) target = $region16
        $region15: #{tpu_custom_call.1} parent=11 // pred_region
          %s166 = ssub.s32 64, 64
          %167 = vsyncadd [#allocation8], %s166
          %s169 = sshll.u32 [#allocation7], 4
          %s170 = int_to_ptr.vmem [resolvable:$true] %s169
          %172 = dma.hbm_to_vmem [thread:$0]  %s1, 64, %s170, [#allocation8]
        $region16: #{tpu_custom_call.1} parent=11 // pred_fallthru
          _
        // Predicated region
        $region17: #{tpu_custom_call.1} parent=11 // pred_check
          %p173 = pneg %p100
        $region18: #{tpu_custom_call.1} parent=11 // pred_check_branch
          %175 = sbr.rel (%p173) target = $region20
        $region19: #{tpu_custom_call.1} parent=11 // pred_region
          %s177 = ssub.s32 128, 128
          %178 = vsyncadd [#allocation8], %s177
          %s180 = sshll.u32 [#allocation9], 4
          %s181 = int_to_ptr.vmem [resolvable:$true] %s180
          %183 = dma.hbm_to_vmem [thread:$0]  %s2, 128, %s181, [#allocation8]
        $region20: #{tpu_custom_call.1} parent=11 // pred_fallthru
          _
        // Predicated region
        $region21: #{tpu_custom_call.1} parent=11 // pred_check
          %p184 = pneg %p121
        $region22: #{tpu_custom_call.1} parent=11 // pred_check_branch
          %186 = sbr.rel (%p184) target = $region24
        $region23: #{tpu_custom_call.1} parent=11 // pred_region
          %s188 = ssub.s32 128, 128
          %189 = vsyncadd [#allocation11], %s188
          %s191 = sshll.u32 [#allocation10], 4
          %s192 = int_to_ptr.vmem [resolvable:$true] %s191
          %194 = dma.hbm_to_vmem [thread:$0]  %s3, 128, %s192, [#allocation11]
        $region24: #{tpu_custom_call.1} parent=11 // pred_fallthru
          _
      $region12: #{tpu_custom_call.1} parent=5 // pred_fallthru
        _
      %p195 = scmp.lt.s32.totalorder %s18, 4
      // Predicated region
      $region25: #{tpu_custom_call.1} parent=5 // pred_check
        %p196 = pneg %p195
      $region26: #{tpu_custom_call.1} parent=5 // pred_check_branch
        %198 = sbr.rel (%p196) target = $region28
      $region27: #{tpu_custom_call.1} parent=5 // pred_region
        // Predicated region
        $region29: #{tpu_custom_call.1} parent=27 // pred_check
          %p199 = pneg %p52
        $region30: #{tpu_custom_call.1} parent=27 // pred_check_branch
          %201 = sbr.rel (%p199) target = $region32
        $region31: #{tpu_custom_call.1} parent=27 // pred_region
          %s202 = sand.u32 %s42, 1
          %s203 = scalar_lea.sflag [#allocation5], %s202
          %s204 = sand.u32 %s42, 1
          %s205 = smul.addr %s204, 112
          %s206 = scalar_lea.vmem [#allocation4], %s205
          %s207 = smul.u32 2, %s26
          %s209 = ssub.s32 1792, 1792
          %210 = vsyncadd %s203, %s209
          %s211 = smul.addr %s25, 56
          %s212 = sadd.s32 %s207, %s211
          %s213 = smul.addr %s212, 64
          %s214 = scalar_lea.hbm %s0, %s213
          %s215 = sshll.u32 %s206, 4
          %s216 = int_to_ptr.vmem [resolvable:$true] %s215
          %221 = dma.hbm_to_vmem [thread:$0]  %s214, 1792, %s216, %s203, 256, 128, 8
        $region32: #{tpu_custom_call.1} parent=27 // pred_fallthru
          _
      $region28: #{tpu_custom_call.1} parent=5 // pred_fallthru
        _
      %p222 = scmp.le.s32.totalorder 1, %s18
      %p223 = scmp.lt.s32.totalorder %s18, 5
      %p224 = pnand %p222, %p223
      %p225 = pneg %p224
      // Predicated region
      $region33: #{tpu_custom_call.1} parent=5 // pred_check
        _
      $region34: #{tpu_custom_call.1} parent=5 // pred_check_branch
        %227 = sbr.rel (%p224) target = $region36
      $region35: #{tpu_custom_call.1} parent=5 // pred_region
        %s228 = ssub.s32 %s18, 1
        %s229 = sand.u32 %s45, 1
        %s230 = scalar_lea.sflag [#allocation5], %s229
        %s231 = sand.u32 %s45, 1
        %s232 = smul.addr %s231, 112
        %s233 = scalar_lea.vmem [#allocation4], %s232
        // Predicated region
        $region37: #{tpu_custom_call.1} parent=35 // pred_check
          %p234 = pneg %p58
        $region38: #{tpu_custom_call.1} parent=35 // pred_check_branch
          %236 = sbr.rel (%p234) target = $region40
        $region39: #{tpu_custom_call.1} parent=35 // pred_region
          %237 = dma.done %s230, 1792
        $region40: #{tpu_custom_call.1} parent=35 // pred_fallthru
          _
        // Predicated region
        $region41: #{tpu_custom_call.1} parent=35 // pred_check
          %p238 = pneg %p79
        $region42: #{tpu_custom_call.1} parent=35 // pred_check_branch
          %240 = sbr.rel (%p238) target = $region44
        $region43: #{tpu_custom_call.1} parent=35 // pred_region
          %241 = dma.done [#allocation8], 64
        $region44: #{tpu_custom_call.1} parent=35 // pred_fallthru
          _
        // Predicated region
        $region45: #{tpu_custom_call.1} parent=35 // pred_check
          %p242 = pneg %p100
        $region46: #{tpu_custom_call.1} parent=35 // pred_check_branch
          %244 = sbr.rel (%p242) target = $region48
        $region47: #{tpu_custom_call.1} parent=35 // pred_region
          %245 = dma.done [#allocation8], 128
        $region48: #{tpu_custom_call.1} parent=35 // pred_fallthru
          _
        // Predicated region
        $region49: #{tpu_custom_call.1} parent=35 // pred_check
          %p246 = pneg %p121
        $region50: #{tpu_custom_call.1} parent=35 // pred_check_branch
          %248 = sbr.rel (%p246) target = $region52
        $region51: #{tpu_custom_call.1} parent=35 // pred_region
          %249 = dma.done [#allocation11], 128
        $region52: #{tpu_custom_call.1} parent=35 // pred_fallthru
          _
        %s250 = sand.u32 %s45, 1
        %s251 = scalar_lea.sflag [#allocation5], %s250
        %s252 = sand.u32 %s45, 1
        %s253 = smul.addr %s252, 112
        %s254 = scalar_lea.vmem [#allocation4], %s253
        %p255 = pneg %p58
        %p256 = pneg %p55
        %p257 = pneg %p79
        %p258 = pneg %p76
        %p259 = pneg %p100
        %p260 = pneg %p97
        %p261 = pneg %p121
        %p262 = pneg %p118
        %p263 = pneg %p147
        %p264 = pneg %p144
        %s265 = sand.u32 %s134, 1
        %s266 = scalar_lea.sflag [#allocation6], %s265
        %s267 = sand.u32 %s134, 1
        %s268 = smul.addr %s267, 32
        %s269 = scalar_lea.vmem [#allocation12], %s268
        %s270 = smul.u32 2, %s28
        %p272 = scmp.eq.s32.totalorder %s28, 0
        // Predicated region
        $region53: #{tpu_custom_call.1} parent=35 // pred_check
          %p273 = pneg %p272
        $region54: #{tpu_custom_call.1} parent=35 // pred_check_branch
          %275 = sbr.rel (%p273) target = $region56
        $region55: #{tpu_custom_call.1} parent=35 // pred_region
          %vm276 = vcmask 7168
          %277 = vst.msk [vmem:[#allocation2] sm:$0xff] %vm276, 0.0
          %278 = vst.msk [vmem:[#allocation3] sm:$0xff] %vm276, 0.0
        $region56: #{tpu_custom_call.1} parent=35 // pred_fallthru
          _
        %v279 = vld [vmem:[#allocation7] sm:$0xf]
        %v280 = vld [vmem:[%s233] sm:$0xff]
        %v281 = vld [vmem:[%s233 + $0x8] sm:$0xff]
        %v282 = vld [vmem:[%s233 + $0x10] sm:$0xff]
        %v283 = vld [vmem:[%s233 + $0x18] sm:$0xff]
        %v284 = vld [vmem:[%s233 + $0x20] sm:$0xff]
        %v285 = vld [vmem:[%s233 + $0x28] sm:$0xff]
        %v286 = vld [vmem:[%s233 + $0x30] sm:$0xff]
        %v287 = vld [vmem:[%s233 + $0x38] sm:$0xff]
        %v288 = vld [vmem:[%s233 + $0x40] sm:$0xff]
        %v289 = vld [vmem:[%s233 + $0x48] sm:$0xff]
        %v290 = vld [vmem:[%s233 + $0x50] sm:$0xff]
        %v291 = vld [vmem:[%s233 + $0x58] sm:$0xff]
        %v292 = vld [vmem:[%s233 + $0x60] sm:$0xff]
        %v293 = vld [vmem:[%s233 + $0x68] sm:$0xff]
        %v308 = vunpack.c.l.b16 %v280
        %v309 = vunpack.c.h.b16 %v280
        %v310 = vunpack.c.l.b16 %v281
        %v311 = vunpack.c.h.b16 %v281
        %v312 = vunpack.c.l.b16 %v282
        %v313 = vunpack.c.h.b16 %v282
        %v314 = vunpack.c.l.b16 %v283
        %v315 = vunpack.c.h.b16 %v283
        %v316 = vunpack.c.l.b16 %v284
        %v317 = vunpack.c.h.b16 %v284
        %v318 = vunpack.c.l.b16 %v285
        %v319 = vunpack.c.h.b16 %v285
        %v320 = vunpack.c.l.b16 %v286
        %v321 = vunpack.c.h.b16 %v286
        %v322 = vunpack.c.l.b16 %v287
        %v323 = vunpack.c.h.b16 %v287
        %v324 = vunpack.c.l.b16 %v288
        %v325 = vunpack.c.h.b16 %v288
        %v326 = vunpack.c.l.b16 %v289
        %v327 = vunpack.c.h.b16 %v289
        %v328 = vunpack.c.l.b16 %v290
        %v329 = vunpack.c.h.b16 %v290
        %v330 = vunpack.c.l.b16 %v291
        %v331 = vunpack.c.h.b16 %v291
        %v332 = vunpack.c.l.b16 %v292
        %v333 = vunpack.c.h.b16 %v292
        %v334 = vunpack.c.l.b16 %v293
        %v335 = vunpack.c.h.b16 %v293
        %v336 = vpack.c.b16 %v310, %v308
        %v337 = vpack.c.b16 %v311, %v309
        %v338 = vpack.c.b16 %v314, %v312
        %v339 = vpack.c.b16 %v315, %v313
        %v340 = vpack.c.b16 %v318, %v316
        %v341 = vpack.c.b16 %v319, %v317
        %v342 = vpack.c.b16 %v322, %v320
        %v343 = vpack.c.b16 %v323, %v321
        %v344 = vpack.c.b16 %v326, %v324
        %v345 = vpack.c.b16 %v327, %v325
        %v346 = vpack.c.b16 %v330, %v328
        %v347 = vpack.c.b16 %v331, %v329
        %v348 = vpack.c.b16 %v334, %v332
        %v349 = vpack.c.b16 %v335, %v333
        %vm364 = vcmask 916480
        %v366 = vsel %vm364, %v279, 0
        %368 = vmatprep.subr.bf16.mxu0 %v337
        %369 = vmatpush1.bf16.msra.mxu0 %v336
        %370 = vmatprep.subr.bf16.mxu0 %v339
        %371 = vmatpush1.bf16.msra.mxu0 %v338
        %372 = vmatprep.subr.bf16.mxu0 %v341
        %373 = vmatpush1.bf16.msra.mxu0 %v340
        %374 = vmatprep.subr.bf16.mxu0 %v343
        %375 = vmatpush1.bf16.msra.mxu0 %v342
        %376 = vmatprep.subr.bf16.mxu0 %v345
        %377 = vmatpush1.bf16.msra.mxu0 %v344
        %378 = vmatprep.subr.bf16.mxu0 %v347
        %379 = vmatpush1.bf16.msra.mxu0 %v346
        %380 = vmatprep.subr.bf16.mxu0 %v349
        %381 = vmatpush1.bf16.msra.mxu0 %v348
        %382 = vmatprep.subr.bf16.mxu0 0
        %383 = vmatpush1.bf16.msra.mxu0 0
        %384 = vmatprep.subr.bf16.mxu0 0
        %385 = vmatpush1.bf16.msra.mxu0 0
        %386 = vmatprep.subr.bf16.mxu0 0
        %387 = vmatpush1.bf16.msra.mxu0 0
        %388 = vmatprep.subr.bf16.mxu0 0
        %389 = vmatpush1.bf16.msra.mxu0 0
        %390 = vmatprep.subr.bf16.mxu0 0
        %391 = vmatpush1.bf16.msra.mxu0 0
        %392 = vmatprep.subr.bf16.mxu0 0
        %393 = vmatpush1.bf16.msra.mxu0 0
        %394 = vmatprep.subr.bf16.mxu0 0
        %395 = vmatpush1.bf16.msra.mxu0 0
        %396 = vmatprep.subr.bf16.mxu0 0
        %397 = vmatpush1.bf16.msra.mxu0 0
        %398 = vmatprep.subr.bf16.mxu0 0
        %399 = vmatpush1.bf16.msra.mxu0 0
        %400 = vmatprep.mubr.bf16.mxu0 0
        %401 = vmatmul.mubr.bf16.gmra.mrb[0].mxu0 %v366
        %v402 = vpop.f32.mrb[0].mxu0
        %v403 = vadd.f32 0.0, %v402
        %v404 = vpop.f32.mrb[0].mxu0
        %v405 = vadd.f32 0.0, %v404
        %v406 = vpop.f32.mrb[0].mxu0
        %v407 = vpop.f32.mrb[0].mxu0
        %408 = vdwg.mxu0
        %v409 = vld [vmem:[#allocation2] sm:$0xff]
        %v410 = vadd.f32 %v403, %v405
        %411 = vadd.xlane.f32.xlu0 %v410
        %v412 = vpop.xlane.xlu0 %411
        %v413 = vadd.f32 %v409, %v412
        %vm414 = vcmask 7168
        %415 = vst.msk [vmem:[#allocation2] sm:$0xff] %vm414, %v413
        %v416 = vld [vmem:[#allocation3] sm:$0xff]
        %v417 = vmul.f32 %v403, %v403
        %v418 = vmul.f32 %v405, %v405
        %v419 = vadd.f32 %v417, %v418
        %420 = vadd.xlane.f32.xlu0 %v419
        %v421 = vpop.xlane.xlu0 %420
        %v422 = vadd.f32 %v416, %v421
        %423 = vst.msk [vmem:[#allocation3] sm:$0xff] %vm414, %v422
        %s424 = smul.u32 %s28, 256
        %s425 = sshra.s32 %s424, 7
        %s426 = sand.u32 %s424, 127
        %s427 = smul.addr %s425, 8
        %s428 = scalar_lea.vmem %s269, %s427 [#allocation12]
        %429 = vst [vmem:[%s428] sm:$0xff] %v403
        %430 = vst [vmem:[%s428 + $0x8] sm:$0xff] %v405
        %p431 = scmp.eq.s32.totalorder %s28, 1
        // Predicated region
        $region57: #{tpu_custom_call.1} parent=35 // pred_check
          %p432 = pneg %p431
        $region58: #{tpu_custom_call.1} parent=35 // pred_check_branch
          %434 = sbr.rel (%p432) target = $region60
        $region59: #{tpu_custom_call.1} parent=35 // pred_region
          %v435 = vld [vmem:[#allocation2] sm:$0xff]
          %v436 = vmul.f32 %v435, 0.001953125
          %v437 = vld [vmem:[#allocation3] sm:$0xff]
          %v438 = vmul.f32 %v437, 0.001953125
          %v439 = vmul.f32 %v436, %v436
          %v440 = vsub.f32 %v438, %v439
          %v441 = vadd.f32 %v440, 1e-05
          %v442 = vrsqrt.pop %v441
          %v443 = vld [vmem:[#allocation9] sm:$0xff]
          %v444 = vmul.f32 %v442, %v443
          %v445 = vld [vmem:[#allocation10] sm:$0xff]
          %v446 = vmul.f32 %v436, %v444
          %v447 = vsub.f32 %v445, %v446
          loop: start=0, step=1, limit=2
          $region61: #{tpu_custom_call.1} parent=59 // loop_pre_header
            _
          $region62: #{tpu_custom_call.1} parent=59 // loop_header
            %s449 = sphi 0, %s453
            %p450 = scmp.ge.s32.totalorder %s449, 2
          $region63: #{tpu_custom_call.1} parent=59 // loop_header_branch
            %452 = sbr.rel (%p450) target = $region67
          $region64: #{tpu_custom_call.1} parent=59 // loop_body
            %s454 = smul.u32 %s449, 256
            %s455 = sshra.s32 %s454, 7
            %s456 = sand.u32 %s454, 127
            %s457 = smul.addr %s455, 8
            %s458 = scalar_lea.vmem %s269, %s457 [#allocation12]
            %v459 = vld [vmem:[%s458] sm:$0xff]
            %v460 = vld [vmem:[%s458 + $0x8] sm:$0xff]
            %462 = vset.pattern.permute.xlu0 0
            %463 = vperm.xlu0 %462, %v444
            %v464 = vpop.permute.xlu0 %463
            %v466 = vmul.f32 %v459, %v464
            %v467 = vmul.f32 %v460, %v464
            %469 = vset.pattern.permute.xlu0 0
            %470 = vperm.xlu0 %469, %v447
            %v471 = vpop.permute.xlu0 %470
            %v473 = vadd.f32 %v466, %v471
            %v474 = vadd.f32 %v467, %v471
            %v475 = vmax.f32 %v473, 0.0
            %v476 = vmax.f32 %v474, 0.0
            %477 = vst [vmem:[%s458] sm:$0xff] %v475
            %478 = vst [vmem:[%s458 + $0x8] sm:$0xff] %v476
          $region65: #{tpu_custom_call.1} parent=59 // loop_footer
            %s453 = sadd.s32 1, %s449
          $region66: #{tpu_custom_call.1} parent=59 // loop_footer_branch
            %448 = sbr.rel target = $region62
          $region67: #{tpu_custom_call.1} parent=59 // loop_exit
            _
        $region60: #{tpu_custom_call.1} parent=35 // pred_fallthru
          _
        %s479 = sand.u32 %s134, 1
        %s480 = scalar_lea.sflag [#allocation6], %s479
        %s481 = sand.u32 %s134, 1
        %s482 = smul.addr %s481, 32
        %s483 = scalar_lea.vmem [#allocation12], %s482
        // Predicated region
        $region68: #{tpu_custom_call.1} parent=35 // pred_check
          %p484 = pneg %p144
        $region69: #{tpu_custom_call.1} parent=35 // pred_check_branch
          %486 = sbr.rel (%p484) target = $region71
        $region70: #{tpu_custom_call.1} parent=35 // pred_region
          %s488 = ssub.s32 512, 512
          %489 = vsyncadd %s480, %s488
          %s490 = smul.addr %s27, 4
          %s491 = smul.addr %s490, 128
          %s492 = scalar_lea.hbm %s4, %s491
          %s494 = sshll.u32 %s483, 4
          %s495 = int_to_ptr.vmem [resolvable:$true] %s494
          %497 = dma.vmem_to_hbm [thread:$0]  %s495, 512, %s492, %s480
        $region71: #{tpu_custom_call.1} parent=35 // pred_fallthru
          _
      $region36: #{tpu_custom_call.1} parent=5 // pred_fallthru
        _
      %p498 = scmp.le.s32.totalorder 2, %s18
      // Predicated region
      $region72: #{tpu_custom_call.1} parent=5 // pred_check
        %p499 = pneg %p498
      $region73: #{tpu_custom_call.1} parent=5 // pred_check_branch
        %501 = sbr.rel (%p499) target = $region75
      $region74: #{tpu_custom_call.1} parent=5 // pred_region
        %s502 = ssub.s32 %s18, 2
        // Predicated region
        $region76: #{tpu_custom_call.1} parent=74 // pred_check
          %p503 = pneg %p150
        $region77: #{tpu_custom_call.1} parent=74 // pred_check_branch
          %505 = sbr.rel (%p503) target = $region79
        $region78: #{tpu_custom_call.1} parent=74 // pred_region
          %s506 = sand.u32 %s135, 1
          %s507 = scalar_lea.sflag [#allocation6], %s506
          %s508 = sand.u32 %s135, 1
          %s509 = smul.addr %s508, 32
          %s510 = scalar_lea.vmem [#allocation12], %s509
          %511 = dma.done %s507, 512
        $region79: #{tpu_custom_call.1} parent=74 // pred_fallthru
          _
      $region75: #{tpu_custom_call.1} parent=5 // pred_fallthru
        _
    $region6: #{tpu_custom_call.1} parent=1 // loop_footer
      %s22 = sadd.s32 1, %s18
    $region7: #{tpu_custom_call.1} parent=1 // loop_footer_branch
      %17 = sbr.rel target = $region3
    $region8: #{tpu_custom_call.1} parent=1 // loop_exit
      _
    %512 = vsyncpa [#allocation5], 1
    %s513 = scalar_lea.sflag [#allocation5], 1
    %514 = vsyncpa %s513, 1
    %515 = vsyncpa [#allocation8], 1
    %516 = vsyncpa [#allocation11], 1
    %517 = vsyncpa [#allocation6], 1
    %s518 = scalar_lea.sflag [#allocation6], 1
    %519 = vsyncpa %s518, 1

</llo_original>
